<compile_context>
chip_gen: v5e
topology: v5e:2x2
jax: 0.10.0
libtpu: 0.0.40
codegen_flags: <defaults>
</compile_context>

<pallas_src>
import jax
import jax.numpy as jnp
from jax.experimental import pallas as pl
from jax.experimental.pallas import tpu as pltpu

HARDSHRINK_LAMBDA = 0.5   # PyTorch F.hardshrink default
LN_EPS = 1e-5             # PyTorch nn.LayerNorm default

H1 = 12                   # fc1 out / LayerNorm(12)
H2 = 6                    # fc4 out / LayerNorm(6)

TM_MAX = 8192             # lane-axis (batch) tile; ~4 MiB live buffers at f32
SPLIT_THRESHOLD = 256     # above this, force grid >= 2 (v7x 2-TC sharding)


def _round_up(n, m):
    return ((n + m - 1) // m) * m


def _hardshrink(x):
    return jnp.where(jnp.abs(x) > HARDSHRINK_LAMBDA, x, jnp.zeros_like(x))


def _layernorm_f(x, gamma, beta):
    """LayerNorm over the feature axis (axis 0 in feature-major layout).

    Variance via E[x^2] - mu^2: two independent reductions instead of a
    dependent (x - mu)^2 pass (shorter serial VALU/XLU chain)."""
    mu = jnp.mean(x, axis=0, keepdims=True)
    ex2 = jnp.mean(x * x, axis=0, keepdims=True)
    var = jnp.maximum(ex2 - mu * mu, 0.0)
    return (x - mu) * jax.lax.rsqrt(var + LN_EPS) * gamma + beta


def net_kernel(x_ref,
               w1_ref, b1_ref, g1_ref, be1_ref,
               w2_ref, b2_ref, g2_ref, be2_ref,
               w3_ref, b3_ref,
               out_ref):
    # --- hoisted resident-parameter loads (full-block, unmasked) ---
    w1 = w1_ref[...]      # (H1, IN)
    b1 = b1_ref[...]      # (H1, 1)
    g1 = g1_ref[...]
    be1 = be1_ref[...]
    w2 = w2_ref[...]      # (H2, H1)
    b2 = b2_ref[...]      # (H2, 1)
    g2 = g2_ref[...]
    be2 = be2_ref[...]
    w3 = w3_ref[...]      # (OUT, H2)
    b3 = b3_ref[...]      # (OUT, 1)

    x = x_ref[...]        # (IN, TM): feature-major, batch on the 128-lane axis

    # fc1 + hardshrink
    h = jnp.dot(w1, x, preferred_element_type=jnp.float32) + b1      # (H1, TM)
    h = _hardshrink(h)

    # fc2: LayerNorm(12) over the feature (sublane) axis
    h = _layernorm_f(h, g1, be1)

    # fc3: Dropout(0.2) — identity in eval/inference mode.
    # TODO(synk): training-mode dropout (Bernoulli mask via pltpu.prng_*, scaled
    # by 1/0.8) not emitted.

    # fc4 + hardshrink
    h = jnp.dot(w2, h, preferred_element_type=jnp.float32) + b2      # (H2, TM)
    h = _hardshrink(h)

    # fc5: LayerNorm(6)
    h = _layernorm_f(h, g2, be2)

    # fc6 + softmax over the feature axis (== dim=1 of the original layout)
    logits = jnp.dot(w3, h, preferred_element_type=jnp.float32) + b3  # (OUT, TM)
    m = jnp.max(logits, axis=0, keepdims=True)
    e = jnp.exp(logits - m)
    denom = jnp.sum(e, axis=0, keepdims=True)
    out_ref[...] = e / denom          # exact normalization: rows sum to 1


def _select_tile(batch):
    """Lane-axis tile. Single tile for small batches; otherwise >= 2 grid steps
    (v7x megacore) with a tile that is a multiple of 128 lanes, capped at
    TM_MAX (well inside the 32 MiB scoped VMEM limit on v5e/v6e/v7x)."""
    if batch <= SPLIT_THRESHOLD:
        return batch
    return min(TM_MAX, _round_up((batch + 1) // 2, 128))


def _net_forward_impl(x, prep):
    batch, input_size = x.shape
    (w1t, b1, g1, be1, w2t, b2, g2, be2, w3t, b3) = prep
    output_size = w3t.shape[0]

    tm = _select_tile(batch)
    grid = (pl.cdiv(batch, tm),)

    # Feature-major: batch on the 128-lane axis (wrapper transpose = layout
    # plumbing; fused under jit).
    x_t = x.T                                  # (input_size, batch)

    flops = 2 * batch * (input_size * H1 + H1 * H2 + H2 * output_size)
    transcendentals = batch * (output_size + 2)   # exp per logit + 2 rsqrt
    bytes_accessed = 4 * (batch * (input_size + output_size)
                          + sum(int(p.size) for p in prep))

    resident = lambda i: (0, 0)                # params: fetched once, VMEM-resident

    out_t = pl.pallas_call(
        net_kernel,
        out_shape=jax.ShapeDtypeStruct((output_size, batch), jnp.float32),
        grid_spec=pltpu.PrefetchScalarGridSpec(
            num_scalar_prefetch=0,
            grid=grid,
            in_specs=[
                pl.BlockSpec((input_size, tm), lambda i: (0, i)),
                pl.BlockSpec(w1t.shape, resident),
                pl.BlockSpec(b1.shape, resident),
                pl.BlockSpec(g1.shape, resident),
                pl.BlockSpec(be1.shape, resident),
                pl.BlockSpec(w2t.shape, resident),
                pl.BlockSpec(b2.shape, resident),
                pl.BlockSpec(g2.shape, resident),
                pl.BlockSpec(be2.shape, resident),
                pl.BlockSpec(w3t.shape, resident),
                pl.BlockSpec(b3.shape, resident),
            ],
            out_specs=pl.BlockSpec((output_size, tm), lambda i: (0, i)),
        ),
        compiler_params=pltpu.CompilerParams(
            dimension_semantics=("parallel",),     # v7x 2-TC sharding; no-op v5e/v6e
            vmem_limit_bytes=32 * 1024 * 1024,     # explicit (v5e default is 16 MiB)
        ),
        cost_estimate=pl.CostEstimate(
            flops=flops,
            transcendentals=transcendentals,
            bytes_accessed=bytes_accessed,
        ),
    )(x_t, w1t, b1, g1, be1, w2t, b2, g2, be2, w3t, b3)

    return out_t.T                               # back to (batch, output_size)


net_forward = jax.jit(_net_forward_impl)


def prepare_params(params):
    """One-time prep (hoisted out of the per-call path): transpose Linear
    weights to [out, in] and reshape bias / LayerNorm vectors to column vectors
    so the kernel runs feature-major (batch on lanes)."""
    (w1, b1, g1, be1, w2, b2, g2, be2, w3, b3) = params
    col = lambda v: jnp.asarray(v, jnp.float32).reshape(-1, 1)
    return (jnp.asarray(w1.T, jnp.float32), col(b1), col(g1), col(be1),
            jnp.asarray(w2.T, jnp.float32), col(b2), col(g2), col(be2),
            jnp.asarray(w3.T, jnp.float32), col(b3))


def init_params(key, input_size, output_size):
    """Deterministic init mimicking PyTorch defaults (uniform for Linear,
    ones/zeros for LayerNorm). Weights stored as [in, out]."""
    def linear(k, fan_in, fan_out):
        kw, kb = jax.random.split(k)
        bound = 1.0 / jnp.sqrt(fan_in)
        w = jax.random.uniform(kw, (fan_in, fan_out), jnp.float32, -bound, bound)
        b = jax.random.uniform(kb, (1, fan_out), jnp.float32, -bound, bound)
        return w, b

    k1, k2, k3 = jax.random.split(key, 3)
    w1, b1 = linear(k1, input_size, H1)
    g1, be1 = jnp.ones((1, H1), jnp.float32), jnp.zeros((1, H1), jnp.float32)
    w2, b2 = linear(k2, H1, H2)
    g2, be2 = jnp.ones((1, H2), jnp.float32), jnp.zeros((1, H2), jnp.float32)
    w3, b3 = linear(k3, H2, output_size)
    return (w1, b1, g1, be1, w2, b2, g2, be2, w3, b3)


def net_forward_ref(x, params):
    """Pure-JAX reference (natural [batch, features] layout)."""
    (w1, b1, g1, be1, w2, b2, g2, be2, w3, b3) = params

    def ln(h, gamma, beta):
        mu = jnp.mean(h, axis=-1, keepdims=True)
        var = jnp.mean((h - mu) * (h - mu), axis=-1, keepdims=True)
        return (h - mu) * jax.lax.rsqrt(var + LN_EPS) * gamma + beta

    h = _hardshrink(x @ w1 + b1)
    h = ln(h, g1, be1)
    h = _hardshrink(h @ w2 + b2)
    h = ln(h, g2, be2)
    return jax.nn.softmax(h @ w3 + b3, axis=1)


def _check(x, prep, params, output_size):
    out = jax.block_until_ready(net_forward(x, prep))
    ref = net_forward_ref(x, params)
    assert out.shape == (x.shape[0], output_size)
    assert jnp.allclose(out, ref, atol=1e-4, rtol=1e-4), "mismatch vs reference"
    assert jnp.allclose(jnp.sum(out, axis=1), 1.0, atol=1e-4), \
        "softmax rows must sum to 1"


if __name__ == "__main__":
    input_size = 32
    output_size = 4

    key = jax.random.PRNGKey(0)
    kx1, kx2, kp = jax.random.split(key, 3)
    params = init_params(kp, input_size, output_size)
    prep = prepare_params(params)          # one-time, outside the per-call path

    # Small-shape check (single tile, batch on lanes).
    x_small = jax.random.normal(kx1, (8, input_size), jnp.float32)
    _check(x_small, prep, params, output_size)

    # Multi-tile check: exercises the batch grid (tm=1024, grid=2, parallel axis).
    x_big = jax.random.normal(kx2, (2048, input_size), jnp.float32)
    _check(x_big, prep, params, output_size)

    print("KERNEL_OK")
</pallas_src>

<mosaic_0001>
module attributes {stable_mosaic.version = 11 : i64} {
  func.func @net_kernel(%arg0: i32, %arg1: memref<32x8xf32, #tpu.memory_space<vmem>>, %arg2: memref<12x32xf32, #tpu.memory_space<vmem>>, %arg3: memref<12x1xf32, #tpu.memory_space<vmem>>, %arg4: memref<12x1xf32, #tpu.memory_space<vmem>>, %arg5: memref<12x1xf32, #tpu.memory_space<vmem>>, %arg6: memref<6x12xf32, #tpu.memory_space<vmem>>, %arg7: memref<6x1xf32, #tpu.memory_space<vmem>>, %arg8: memref<6x1xf32, #tpu.memory_space<vmem>>, %arg9: memref<6x1xf32, #tpu.memory_space<vmem>>, %arg10: memref<4x6xf32, #tpu.memory_space<vmem>>, %arg11: memref<4x1xf32, #tpu.memory_space<vmem>>, %arg12: memref<4x8xf32, #tpu.memory_space<vmem>>) attributes {dimension_semantics = [#tpu.dimension_semantics<parallel>], iteration_bounds = array<i64: 1>, scalar_prefetch = 0 : i64, scratch_operands = 0 : i64, tpu.core_type = #tpu.core_type<tc>, window_params = [{transform_indices = @transform_0, window_bounds = array<i64: 32, 8>}, {pipeline_mode = #tpu.pipeline_mode<synchronous>, transform_indices = @transform_1, window_bounds = array<i64: 12, 32>}, {pipeline_mode = #tpu.pipeline_mode<synchronous>, transform_indices = @transform_2, window_bounds = array<i64: 12, 1>}, {pipeline_mode = #tpu.pipeline_mode<synchronous>, transform_indices = @transform_3, window_bounds = array<i64: 12, 1>}, {pipeline_mode = #tpu.pipeline_mode<synchronous>, transform_indices = @transform_4, window_bounds = array<i64: 12, 1>}, {pipeline_mode = #tpu.pipeline_mode<synchronous>, transform_indices = @transform_5, window_bounds = array<i64: 6, 12>}, {pipeline_mode = #tpu.pipeline_mode<synchronous>, transform_indices = @transform_6, window_bounds = array<i64: 6, 1>}, {pipeline_mode = #tpu.pipeline_mode<synchronous>, transform_indices = @transform_7, window_bounds = array<i64: 6, 1>}, {pipeline_mode = #tpu.pipeline_mode<synchronous>, transform_indices = @transform_8, window_bounds = array<i64: 6, 1>}, {pipeline_mode = #tpu.pipeline_mode<synchronous>, transform_indices = @transform_9, window_bounds = array<i64: 4, 6>}, {pipeline_mode = #tpu.pipeline_mode<synchronous>, transform_indices = @transform_10, window_bounds = array<i64: 4, 1>}, {transform_indices = @transform_11, window_bounds = array<i64: 4, 8>}]} {
    %c0 = arith.constant 0 : index
    %c0_0 = arith.constant 0 : index
    %0 = vector.load %arg2[%c0, %c0_0] : memref<12x32xf32, #tpu.memory_space<vmem>>, vector<12x32xf32>
    %c0_1 = arith.constant 0 : index
    %c0_2 = arith.constant 0 : index
    %1 = vector.load %arg3[%c0_1, %c0_2] : memref<12x1xf32, #tpu.memory_space<vmem>>, vector<12x1xf32>
    %c0_3 = arith.constant 0 : index
    %c0_4 = arith.constant 0 : index
    %2 = vector.load %arg4[%c0_3, %c0_4] : memref<12x1xf32, #tpu.memory_space<vmem>>, vector<12x1xf32>
    %c0_5 = arith.constant 0 : index
    %c0_6 = arith.constant 0 : index
    %3 = vector.load %arg5[%c0_5, %c0_6] : memref<12x1xf32, #tpu.memory_space<vmem>>, vector<12x1xf32>
    %c0_7 = arith.constant 0 : index
    %c0_8 = arith.constant 0 : index
    %4 = vector.load %arg6[%c0_7, %c0_8] : memref<6x12xf32, #tpu.memory_space<vmem>>, vector<6x12xf32>
    %c0_9 = arith.constant 0 : index
    %c0_10 = arith.constant 0 : index
    %5 = vector.load %arg7[%c0_9, %c0_10] : memref<6x1xf32, #tpu.memory_space<vmem>>, vector<6x1xf32>
    %c0_11 = arith.constant 0 : index
    %c0_12 = arith.constant 0 : index
    %6 = vector.load %arg8[%c0_11, %c0_12] : memref<6x1xf32, #tpu.memory_space<vmem>>, vector<6x1xf32>
    %c0_13 = arith.constant 0 : index
    %c0_14 = arith.constant 0 : index
    %7 = vector.load %arg9[%c0_13, %c0_14] : memref<6x1xf32, #tpu.memory_space<vmem>>, vector<6x1xf32>
    %c0_15 = arith.constant 0 : index
    %c0_16 = arith.constant 0 : index
    %8 = vector.load %arg10[%c0_15, %c0_16] : memref<4x6xf32, #tpu.memory_space<vmem>>, vector<4x6xf32>
    %c0_17 = arith.constant 0 : index
    %c0_18 = arith.constant 0 : index
    %9 = vector.load %arg11[%c0_17, %c0_18] : memref<4x1xf32, #tpu.memory_space<vmem>>, vector<4x1xf32>
    %c0_19 = arith.constant 0 : index
    %c0_20 = arith.constant 0 : index
    %10 = vector.load %arg1[%c0_19, %c0_20] : memref<32x8xf32, #tpu.memory_space<vmem>>, vector<32x8xf32>
    %cst = arith.constant dense<0.000000e+00> : vector<12x8xf32>
    %11 = tpu.matmul %0, %10, %cst {dimension_numbers = #tpu.dot_dimension_numbers<[1], [0], [0], [1], [0, 0, 1, 1], [], []>} : vector<12x32xf32>, vector<32x8xf32>, vector<12x8xf32> -> vector<12x8xf32>
    %12 = vector.broadcast %1 : vector<12x1xf32> to vector<12x8xf32>
    %13 = arith.addf %11, %12 : vector<12x8xf32>
    %14 = math.absf %13 : vector<12x8xf32>
    %cst_21 = arith.constant 5.000000e-01 : f32
    %15 = vector.broadcast %cst_21 : f32 to vector<12x8xf32>
    %16 = arith.cmpf ogt, %14, %15 : vector<12x8xf32>
    %cst_22 = arith.constant 0.000000e+00 : f32
    %17 = vector.broadcast %cst_22 : f32 to vector<12x8xf32>
    %18 = arith.select %16, %13, %17 : vector<12x8xi1>, vector<12x8xf32>
    %cst_23 = arith.constant dense<0.000000e+00> : vector<8xf32>
    %19 = vector.multi_reduction <add>, %18, %cst_23 [0] : vector<12x8xf32> to vector<8xf32>
    %20 = vector.shape_cast %19 : vector<8xf32> to vector<1x8xf32>
    %cst_24 = arith.constant 1.200000e+01 : f32
    %21 = vector.broadcast %cst_24 : f32 to vector<1x8xf32>
    %22 = arith.divf %20, %21 : vector<1x8xf32>
    %23 = arith.mulf %18, %18 : vector<12x8xf32>
    %cst_25 = arith.constant dense<0.000000e+00> : vector<8xf32>
    %24 = vector.multi_reduction <add>, %23, %cst_25 [0] : vector<12x8xf32> to vector<8xf32>
    %25 = vector.shape_cast %24 : vector<8xf32> to vector<1x8xf32>
    %cst_26 = arith.constant 1.200000e+01 : f32
    %26 = vector.broadcast %cst_26 : f32 to vector<1x8xf32>
    %27 = arith.divf %25, %26 : vector<1x8xf32>
    %28 = arith.mulf %22, %22 : vector<1x8xf32>
    %29 = arith.subf %27, %28 : vector<1x8xf32>
    %cst_27 = arith.constant 0.000000e+00 : f32
    %30 = vector.broadcast %cst_27 : f32 to vector<1x8xf32>
    %31 = arith.maximumf %29, %30 : vector<1x8xf32>
    %32 = vector.broadcast %22 : vector<1x8xf32> to vector<12x8xf32>
    %33 = arith.subf %18, %32 : vector<12x8xf32>
    %cst_28 = arith.constant 9.99999974E-6 : f32
    %34 = vector.broadcast %cst_28 : f32 to vector<1x8xf32>
    %35 = arith.addf %31, %34 : vector<1x8xf32>
    %36 = math.rsqrt %35 : vector<1x8xf32>
    %37 = vector.broadcast %36 : vector<1x8xf32> to vector<12x8xf32>
    %38 = arith.mulf %33, %37 : vector<12x8xf32>
    %39 = vector.broadcast %2 : vector<12x1xf32> to vector<12x8xf32>
    %40 = arith.mulf %38, %39 : vector<12x8xf32>
    %41 = vector.broadcast %3 : vector<12x1xf32> to vector<12x8xf32>
    %42 = arith.addf %40, %41 : vector<12x8xf32>
    %cst_29 = arith.constant dense<0.000000e+00> : vector<6x8xf32>
    %43 = tpu.matmul %4, %42, %cst_29 {dimension_numbers = #tpu.dot_dimension_numbers<[1], [0], [0], [1], [0, 0, 1, 1], [], []>} : vector<6x12xf32>, vector<12x8xf32>, vector<6x8xf32> -> vector<6x8xf32>
    %44 = vector.broadcast %5 : vector<6x1xf32> to vector<6x8xf32>
    %45 = arith.addf %43, %44 : vector<6x8xf32>
    %46 = math.absf %45 : vector<6x8xf32>
    %cst_30 = arith.constant 5.000000e-01 : f32
    %47 = vector.broadcast %cst_30 : f32 to vector<6x8xf32>
    %48 = arith.cmpf ogt, %46, %47 : vector<6x8xf32>
    %cst_31 = arith.constant 0.000000e+00 : f32
    %49 = vector.broadcast %cst_31 : f32 to vector<6x8xf32>
    %50 = arith.select %48, %45, %49 : vector<6x8xi1>, vector<6x8xf32>
    %cst_32 = arith.constant dense<0.000000e+00> : vector<8xf32>
    %51 = vector.multi_reduction <add>, %50, %cst_32 [0] : vector<6x8xf32> to vector<8xf32>
    %52 = vector.shape_cast %51 : vector<8xf32> to vector<1x8xf32>
    %cst_33 = arith.constant 6.000000e+00 : f32
    %53 = vector.broadcast %cst_33 : f32 to vector<1x8xf32>
    %54 = arith.divf %52, %53 : vector<1x8xf32>
    %55 = arith.mulf %50, %50 : vector<6x8xf32>
    %cst_34 = arith.constant dense<0.000000e+00> : vector<8xf32>
    %56 = vector.multi_reduction <add>, %55, %cst_34 [0] : vector<6x8xf32> to vector<8xf32>
    %57 = vector.shape_cast %56 : vector<8xf32> to vector<1x8xf32>
    %cst_35 = arith.constant 6.000000e+00 : f32
    %58 = vector.broadcast %cst_35 : f32 to vector<1x8xf32>
    %59 = arith.divf %57, %58 : vector<1x8xf32>
    %60 = arith.mulf %54, %54 : vector<1x8xf32>
    %61 = arith.subf %59, %60 : vector<1x8xf32>
    %cst_36 = arith.constant 0.000000e+00 : f32
    %62 = vector.broadcast %cst_36 : f32 to vector<1x8xf32>
    %63 = arith.maximumf %61, %62 : vector<1x8xf32>
    %64 = vector.broadcast %54 : vector<1x8xf32> to vector<6x8xf32>
    %65 = arith.subf %50, %64 : vector<6x8xf32>
    %cst_37 = arith.constant 9.99999974E-6 : f32
    %66 = vector.broadcast %cst_37 : f32 to vector<1x8xf32>
    %67 = arith.addf %63, %66 : vector<1x8xf32>
    %68 = math.rsqrt %67 : vector<1x8xf32>
    %69 = vector.broadcast %68 : vector<1x8xf32> to vector<6x8xf32>
    %70 = arith.mulf %65, %69 : vector<6x8xf32>
    %71 = vector.broadcast %6 : vector<6x1xf32> to vector<6x8xf32>
    %72 = arith.mulf %70, %71 : vector<6x8xf32>
    %73 = vector.broadcast %7 : vector<6x1xf32> to vector<6x8xf32>
    %74 = arith.addf %72, %73 : vector<6x8xf32>
    %cst_38 = arith.constant dense<0.000000e+00> : vector<4x8xf32>
    %75 = tpu.matmul %8, %74, %cst_38 {dimension_numbers = #tpu.dot_dimension_numbers<[1], [0], [0], [1], [0, 0, 1, 1], [], []>} : vector<4x6xf32>, vector<6x8xf32>, vector<4x8xf32> -> vector<4x8xf32>
    %76 = vector.broadcast %9 : vector<4x1xf32> to vector<4x8xf32>
    %77 = arith.addf %75, %76 : vector<4x8xf32>
    %cst_39 = arith.constant dense<0xFF800000> : vector<8xf32>
    %78 = vector.multi_reduction <maximumf>, %77, %cst_39 [0] : vector<4x8xf32> to vector<8xf32>
    %79 = vector.shape_cast %78 : vector<8xf32> to vector<1x8xf32>
    %80 = vector.broadcast %79 : vector<1x8xf32> to vector<4x8xf32>
    %81 = arith.subf %77, %80 : vector<4x8xf32>
    %82 = math.exp %81 : vector<4x8xf32>
    %cst_40 = arith.constant dense<0.000000e+00> : vector<8xf32>
    %83 = vector.multi_reduction <add>, %82, %cst_40 [0] : vector<4x8xf32> to vector<8xf32>
    %84 = vector.shape_cast %83 : vector<8xf32> to vector<1x8xf32>
    %85 = vector.broadcast %84 : vector<1x8xf32> to vector<4x8xf32>
    %86 = arith.divf %82, %85 : vector<4x8xf32>
    %c0_41 = arith.constant 0 : index
    %c0_42 = arith.constant 0 : index
    %87 = vector.load %arg12[%c0_41, %c0_42] : memref<4x8xf32, #tpu.memory_space<vmem>>, vector<4x8xf32>
    tpu.vector_store %arg12[%c0_41, %c0_42], %86 {strides = array<i32>} : memref<4x8xf32, #tpu.memory_space<vmem>>, vector<4x8xf32>,
    return
  }
  func.func @transform_0(%arg0: i32) -> (i32, i32) {
    %c0_i32 = arith.constant 0 : i32
    %c0_i32_0 = arith.constant 0 : i32
    return %c0_i32, %arg0 : i32, i32
  }
  func.func @transform_1(%arg0: i32) -> (i32, i32) {
    %c0_i32 = arith.constant 0 : i32
    %c0_i32_0 = arith.constant 0 : i32
    %c0_i32_1 = arith.constant 0 : i32
    return %c0_i32, %c0_i32_0 : i32, i32
  }
  func.func @transform_2(%arg0: i32) -> (i32, i32) {
    %c0_i32 = arith.constant 0 : i32
    %c0_i32_0 = arith.constant 0 : i32
    %c0_i32_1 = arith.constant 0 : i32
    return %c0_i32, %c0_i32_0 : i32, i32
  }
  func.func @transform_3(%arg0: i32) -> (i32, i32) {
    %c0_i32 = arith.constant 0 : i32
    %c0_i32_0 = arith.constant 0 : i32
    %c0_i32_1 = arith.constant 0 : i32
    return %c0_i32, %c0_i32_0 : i32, i32
  }
  func.func @transform_4(%arg0: i32) -> (i32, i32) {
    %c0_i32 = arith.constant 0 : i32
    %c0_i32_0 = arith.constant 0 : i32
    %c0_i32_1 = arith.constant 0 : i32
    return %c0_i32, %c0_i32_0 : i32, i32
  }
  func.func @transform_5(%arg0: i32) -> (i32, i32) {
    %c0_i32 = arith.constant 0 : i32
    %c0_i32_0 = arith.constant 0 : i32
    %c0_i32_1 = arith.constant 0 : i32
    return %c0_i32, %c0_i32_0 : i32, i32
  }
  func.func @transform_6(%arg0: i32) -> (i32, i32) {
    %c0_i32 = arith.constant 0 : i32
    %c0_i32_0 = arith.constant 0 : i32
    %c0_i32_1 = arith.constant 0 : i32
    return %c0_i32, %c0_i32_0 : i32, i32
  }
  func.func @transform_7(%arg0: i32) -> (i32, i32) {
    %c0_i32 = arith.constant 0 : i32
    %c0_i32_0 = arith.constant 0 : i32
    %c0_i32_1 = arith.constant 0 : i32
    return %c0_i32, %c0_i32_0 : i32, i32
  }
  func.func @transform_8(%arg0: i32) -> (i32, i32) {
    %c0_i32 = arith.constant 0 : i32
    %c0_i32_0 = arith.constant 0 : i32
    %c0_i32_1 = arith.constant 0 : i32
    return %c0_i32, %c0_i32_0 : i32, i32
  }
  func.func @transform_9(%arg0: i32) -> (i32, i32) {
    %c0_i32 = arith.constant 0 : i32
    %c0_i32_0 = arith.constant 0 : i32
    %c0_i32_1 = arith.constant 0 : i32
    return %c0_i32, %c0_i32_0 : i32, i32
  }
  func.func @transform_10(%arg0: i32) -> (i32, i32) {
    %c0_i32 = arith.constant 0 : i32
    %c0_i32_0 = arith.constant 0 : i32
    %c0_i32_1 = arith.constant 0 : i32
    return %c0_i32, %c0_i32_0 : i32, i32
  }
  func.func @transform_11(%arg0: i32) -> (i32, i32) {
    %c0_i32 = arith.constant 0 : i32
    %c0_i32_0 = arith.constant 0 : i32
    return %c0_i32, %arg0 : i32, i32
  }
}

</mosaic_0001>

<llo_original>
// kernel: _net_forward_impl.1
$region0: #{_net_forward_impl.1}
  #allocation0 [shape = 'u32[]', space=smem, size = 0x4, offset = 0x4, fixed_abs, tag = 'smem constant byte address 0x4 - core index']
  #allocation1 [shape = 'u32[72,128]{1,0:T(1,128)}', space=vmem, size = 0x9000, scoped, tag = 'internal scratch']
  %s0 = inlined_call_operand.vmem [shape: f32[32,8], index: 0, kind: input, shape index: {}]
  %s1 = inlined_call_operand.vmem [shape: f32[12,32], index: 1, kind: input, shape index: {}]
  %s2 = inlined_call_operand.vmem [shape: f32[12,1], index: 2, kind: input, shape index: {}]
  %s3 = inlined_call_operand.vmem [shape: f32[12,1], index: 3, kind: input, shape index: {}]
  %s4 = inlined_call_operand.vmem [shape: f32[12,1], index: 4, kind: input, shape index: {}]
  %s5 = inlined_call_operand.vmem [shape: f32[6,12], index: 5, kind: input, shape index: {}]
  %s6 = inlined_call_operand.vmem [shape: f32[6,1], index: 6, kind: input, shape index: {}]
  %s7 = inlined_call_operand.vmem [shape: f32[6,1], index: 7, kind: input, shape index: {}]
  %s8 = inlined_call_operand.vmem [shape: f32[6,1], index: 8, kind: input, shape index: {}]
  %s9 = inlined_call_operand.vmem [shape: f32[4,6], index: 9, kind: input, shape index: {}]
  %s10 = inlined_call_operand.vmem [shape: f32[4,1], index: 10, kind: input, shape index: {}]
  %s11 = inlined_call_operand.hbm [shape: f32[4,8], index: 11, kind: output, shape index: {}]
  %s12 = sld [smem:[#allocation0]]
  $region54: #{_net_forward_impl.1} parent=0
    _
  %s14 = ssub.s32 1, %s12
  %s15 = scalar_select 0, %s14, %s12
  $region1: #{_net_forward_impl.1} parent=0
    #allocation2 [shape = 'u8[2048]{0}', space=vmem, size = 0x800, scoped, tag = 'output window, operand 0, single buffered']
    #allocation3 [shape = 's32[1]{0}', space=sflag, size = 0x4, scoped, tag = 'scoped memory for _net_forward_impl.1']
    %16 = vsyncpa [#allocation3], 0
    // Predicated region
    $region2: #{_net_forward_impl.1} parent=1 // pred_check
      _
    $region3: #{_net_forward_impl.1} parent=1 // pred_check_branch
      %18 = sbr.rel (0) target = $region5
    $region4: #{_net_forward_impl.1} parent=1 // pred_region
      _
    $region5: #{_net_forward_impl.1} parent=1 // pred_fallthru
      _
    // Predicated region
    $region6: #{_net_forward_impl.1} parent=1 // pred_check
      _
    $region7: #{_net_forward_impl.1} parent=1 // pred_check_branch
      %20 = sbr.rel (0) target = $region9
    $region8: #{_net_forward_impl.1} parent=1 // pred_region
      _
    $region9: #{_net_forward_impl.1} parent=1 // pred_fallthru
      _
    // Predicated region
    $region10: #{_net_forward_impl.1} parent=1 // pred_check
      _
    $region11: #{_net_forward_impl.1} parent=1 // pred_check_branch
      %22 = sbr.rel (0) target = $region13
    $region12: #{_net_forward_impl.1} parent=1 // pred_region
      _
    $region13: #{_net_forward_impl.1} parent=1 // pred_fallthru
      _
    // Predicated region
    $region14: #{_net_forward_impl.1} parent=1 // pred_check
      _
    $region15: #{_net_forward_impl.1} parent=1 // pred_check_branch
      %24 = sbr.rel (0) target = $region17
    $region16: #{_net_forward_impl.1} parent=1 // pred_region
      _
    $region17: #{_net_forward_impl.1} parent=1 // pred_fallthru
      _
    // Predicated region
    $region18: #{_net_forward_impl.1} parent=1 // pred_check
      _
    $region19: #{_net_forward_impl.1} parent=1 // pred_check_branch
      %26 = sbr.rel (0) target = $region21
    $region20: #{_net_forward_impl.1} parent=1 // pred_region
      _
    $region21: #{_net_forward_impl.1} parent=1 // pred_fallthru
      _
    // Predicated region
    $region22: #{_net_forward_impl.1} parent=1 // pred_check
      _
    $region23: #{_net_forward_impl.1} parent=1 // pred_check_branch
      %28 = sbr.rel (0) target = $region25
    $region24: #{_net_forward_impl.1} parent=1 // pred_region
      _
    $region25: #{_net_forward_impl.1} parent=1 // pred_fallthru
      _
    // Predicated region
    $region26: #{_net_forward_impl.1} parent=1 // pred_check
      _
    $region27: #{_net_forward_impl.1} parent=1 // pred_check_branch
      %30 = sbr.rel (0) target = $region29
    $region28: #{_net_forward_impl.1} parent=1 // pred_region
      _
    $region29: #{_net_forward_impl.1} parent=1 // pred_fallthru
      _
    // Predicated region
    $region30: #{_net_forward_impl.1} parent=1 // pred_check
      _
    $region31: #{_net_forward_impl.1} parent=1 // pred_check_branch
      %32 = sbr.rel (0) target = $region33
    $region32: #{_net_forward_impl.1} parent=1 // pred_region
      _
    $region33: #{_net_forward_impl.1} parent=1 // pred_fallthru
      _
    // Predicated region
    $region34: #{_net_forward_impl.1} parent=1 // pred_check
      _
    $region35: #{_net_forward_impl.1} parent=1 // pred_check_branch
      %34 = sbr.rel (0) target = $region37
    $region36: #{_net_forward_impl.1} parent=1 // pred_region
      _
    $region37: #{_net_forward_impl.1} parent=1 // pred_fallthru
      _
    // Predicated region
    $region38: #{_net_forward_impl.1} parent=1 // pred_check
      _
    $region39: #{_net_forward_impl.1} parent=1 // pred_check_branch
      %36 = sbr.rel (0) target = $region41
    $region40: #{_net_forward_impl.1} parent=1 // pred_region
      _
    $region41: #{_net_forward_impl.1} parent=1 // pred_fallthru
      _
    // Predicated region
    $region42: #{_net_forward_impl.1} parent=1 // pred_check
      _
    $region43: #{_net_forward_impl.1} parent=1 // pred_check_branch
      %38 = sbr.rel (0) target = $region45
    $region44: #{_net_forward_impl.1} parent=1 // pred_region
      _
    $region45: #{_net_forward_impl.1} parent=1 // pred_fallthru
      _
    %v39 = vld [vmem:[%s1] sm:$0xff]
    %v40 = vld [vmem:[%s1 + $0x8] sm:$0xf]
    %v41 = vld [vmem:[%s2] sm:$0xff]
    %v42 = vld [vmem:[%s2 + $0x8] sm:$0xf]
    %v43 = vld [vmem:[%s3] sm:$0xff]
    %v44 = vld [vmem:[%s3 + $0x8] sm:$0xf]
    %v45 = vld [vmem:[%s4] sm:$0xff]
    %v46 = vld [vmem:[%s4 + $0x8] sm:$0xf]
    %v47 = vld [vmem:[%s5] sm:$0x3f]
    %v48 = vld [vmem:[%s6] sm:$0x3f]
    %v49 = vld [vmem:[%s7] sm:$0x3f]
    %v50 = vld [vmem:[%s8] sm:$0x3f]
    %v51 = vld [vmem:[%s9] sm:$0xf]
    %v52 = vld [vmem:[%s10] sm:$0xf]
    %v53 = vld [vmem:[%s0] sm:$0xff]
    %v54 = vld [vmem:[%s0 + $0x8] sm:$0xff]
    %v55 = vld [vmem:[%s0 + $0x10] sm:$0xff]
    %v56 = vld [vmem:[%s0 + $0x18] sm:$0xff]
    %58 = vset.pattern.permute.xlu0 0
    %59 = vperm.xlu0 %58, %v41
    %v60 = vpop.permute.xlu0 %59
    %63 = vset.pattern.permute.xlu0 0
    %64 = vperm.xlu0 %63, %v42
    %v65 = vpop.permute.xlu0 %64
    %vm67 = vcmask 261120
    %v69 = vsel %vm67, %v39, 0
    %v72 = vsel %vm67, %v40, 0
    %74 = vmatpush.msra.mxu0 0.0
    %75 = vmatpush.msra.mxu0 0.0
    %76 = vmatpush.msra.mxu0 0.0
    %77 = vmatpush.msra.mxu0 0.0
    %78 = vmatpush.msra.mxu0 0.0
    %79 = vmatpush.msra.mxu0 0.0
    %80 = vmatpush.msra.mxu0 0.0
    %81 = vmatpush.msra.mxu0 0.0
    %82 = vmatpush.msra.mxu0 0.0
    %83 = vmatpush.msra.mxu0 0.0
    %84 = vmatpush.msra.mxu0 0.0
    %85 = vmatpush.msra.mxu0 0.0
    %86 = vmatpush.msra.mxu0 %v56
    %87 = vmatpush.msra.mxu0 %v55
    %88 = vmatpush.msra.mxu0 %v54
    %89 = vmatpush.msra.mxu0 %v53
    %90 = vmatmul.f32.gmra.mxu0 %v69
    %v91 = vpop.f32.mrf.mxu0
    %v92 = vadd.f32 %v60, %v91
    %93 = vmatmul.f32.gmra.mxu0 %v72
    %v94 = vpop.f32.mrf.mxu0
    %v95 = vadd.f32 %v65, %v94
    %96 = vdwg.mxu0
    %v97 = vand.u32 2147483647, %v92
    %v98 = vand.u32 2147483647, %v95
    %vm99 = vcmp.gt.f32.partialorder %v97, 0.5
    %vm100 = vcmp.gt.f32.partialorder %v98, 0.5
    %v101 = vsel %vm99, %v92, 0.0
    %v102 = vsel %vm100, %v95, 0.0
    %vm103 = vcmask 64512
    %v104 = vsel %vm103, %v101, 0.0
    %vm105 = vcmask 60416
    %v106 = vsel %vm105, %v102, 0.0
    %v107 = vadd.f32 %v104, %v106
    %v108 = vrot.slane %v107, 4
    %v109 = vadd.f32 %v107, %v108
    %v110 = vrot.slane %v109, 2
    %v111 = vadd.f32 %v109, %v110
    %v112 = vrot.slane %v111, 1
    %v113 = vadd.f32 %v111, %v112
    %v114 = vrcp.pop 12.0
    %v115 = vmul.f32 12.0, %v114
    %v116 = vsub.f32 1.0, %v115
    %v117 = vmul.f32 %v114, %v116
    %v118 = vadd.f32 %v114, %v117
    %vm119 = vweird.f32 %v114
    %v120 = vsel %vm119, %v114, %v118
    %v121 = vmul.f32 %v113, %v120
    %v122 = vmul.f32 %v101, %v101
    %v123 = vmul.f32 %v102, %v102
    %v124 = vsel %vm103, %v122, 0.0
    %v125 = vsel %vm105, %v123, 0.0
    %v126 = vadd.f32 %v124, %v125
    %v127 = vrot.slane %v126, 4
    %v128 = vadd.f32 %v126, %v127
    %v129 = vrot.slane %v128, 2
    %v130 = vadd.f32 %v128, %v129
    %v131 = vrot.slane %v130, 1
    %v132 = vadd.f32 %v130, %v131
    %v133 = vmul.f32 %v132, %v120
    %v134 = vmul.f32 %v121, %v121
    %v135 = vsub.f32 %v133, %v134
    %v136 = vmax.f32 %v135, 0.0
    %v137 = vsub.f32 %v101, %v121
    %v138 = vsub.f32 %v102, %v121
    %v139 = vadd.f32 %v136, 1e-05
    %v140 = vrsqrt.pop %v139
    %v141 = vmul.f32 %v140, %v139
    %v142 = vmul.f32 %v141, %v140
    %v143 = vmul.f32 0.5, %v142
    %v144 = vsub.f32 1.5, %v143
    %v145 = vmul.f32 %v140, %v144
    %vm146 = vweird.f32 %v139
    %vm147 = vweird.f32 %v140
    %vm148 = vmor %vm146, %vm147
    %v149 = vsel %vm148, %v140, %v145
    %v150 = vmul.f32 %v137, %v149
    %v151 = vmul.f32 %v138, %v149
    %153 = vset.pattern.permute.xlu0 0
    %154 = vperm.xlu0 %153, %v43
    %v155 = vpop.permute.xlu0 %154
    %158 = vset.pattern.permute.xlu0 0
    %159 = vperm.xlu0 %158, %v44
    %v160 = vpop.permute.xlu0 %159
    %v162 = vmul.f32 %v150, %v155
    %v163 = vmul.f32 %v151, %v160
    %165 = vset.pattern.permute.xlu0 0
    %166 = vperm.xlu0 %165, %v45
    %v167 = vpop.permute.xlu0 %166
    %170 = vset.pattern.permute.xlu0 0
    %171 = vperm.xlu0 %170, %v46
    %v172 = vpop.permute.xlu0 %171
    %v174 = vadd.f32 %v162, %v167
    %v175 = vadd.f32 %v163, %v172
    %177 = vset.pattern.permute.xlu0 0
    %178 = vperm.xlu0 %177, %v48
    %v179 = vpop.permute.xlu0 %178
    %vm181 = vcmask 97280
    %v183 = vsel %vm181, %v47, 0
    %vm185 = vcmask 1043456
    %v187 = vsel %vm185, %v175, 0
    %189 = vmatpush.msra.mxu0 0.0
    %190 = vmatpush.msra.mxu0 0.0
    %191 = vmatpush.msra.mxu0 0.0
    %192 = vmatpush.msra.mxu0 0.0
    %193 = vmatpush.msra.mxu0 0.0
    %194 = vmatpush.msra.mxu0 0.0
    %195 = vmatpush.msra.mxu0 0.0
    %196 = vmatpush.msra.mxu0 0.0
    %197 = vmatpush.msra.mxu0 0.0
    %198 = vmatpush.msra.mxu0 0.0
    %199 = vmatpush.msra.mxu0 0.0
    %200 = vmatpush.msra.mxu0 0.0
    %201 = vmatpush.msra.mxu0 0.0
    %202 = vmatpush.msra.mxu0 0.0
    %203 = vmatpush.msra.mxu0 %v187
    %204 = vmatpush.msra.mxu0 %v174
    %205 = vmatmul.f32.gmra.mxu0 %v183
    %v206 = vpop.f32.mrf.mxu0
    %v207 = vadd.f32 %v179, %v206
    %208 = vdwg.mxu0
    %v209 = vand.u32 2147483647, %v207
    %vm210 = vcmp.gt.f32.partialorder %v209, 0.5
    %v211 = vsel %vm210, %v207, 0.0
    %vm212 = vcmask 62464
    %v213 = vsel %vm212, %v211, 0.0
    %v214 = vrot.slane %v213, 4
    %v215 = vadd.f32 %v213, %v214
    %v216 = vrot.slane %v215, 2
    %v217 = vadd.f32 %v215, %v216
    %v218 = vrot.slane %v217, 1
    %v219 = vadd.f32 %v217, %v218
    %v220 = vrcp.pop 6.0
    %v221 = vmul.f32 6.0, %v220
    %v222 = vsub.f32 1.0, %v221
    %v223 = vmul.f32 %v220, %v222
    %v224 = vadd.f32 %v220, %v223
    %vm225 = vweird.f32 %v220
    %v226 = vsel %vm225, %v220, %v224
    %v227 = vmul.f32 %v219, %v226
    %v228 = vmul.f32 %v211, %v211
    %v229 = vsel %vm212, %v228, 0.0
    %v230 = vrot.slane %v229, 4
    %v231 = vadd.f32 %v229, %v230
    %v232 = vrot.slane %v231, 2
    %v233 = vadd.f32 %v231, %v232
    %v234 = vrot.slane %v233, 1
    %v235 = vadd.f32 %v233, %v234
    %v236 = vmul.f32 %v235, %v226
    %v237 = vmul.f32 %v227, %v227
    %v238 = vsub.f32 %v236, %v237
    %v239 = vmax.f32 %v238, 0.0
    %v240 = vsub.f32 %v211, %v227
    %v241 = vadd.f32 %v239, 1e-05
    %v242 = vrsqrt.pop %v241
    %v243 = vmul.f32 %v242, %v241
    %v244 = vmul.f32 %v243, %v242
    %v245 = vmul.f32 0.5, %v244
    %v246 = vsub.f32 1.5, %v245
    %v247 = vmul.f32 %v242, %v246
    %vm248 = vweird.f32 %v241
    %vm249 = vweird.f32 %v242
    %vm250 = vmor %vm248, %vm249
    %v251 = vsel %vm250, %v242, %v247
    %v252 = vmul.f32 %v240, %v251
    %254 = vset.pattern.permute.xlu0 0
    %255 = vperm.xlu0 %254, %v49
    %v256 = vpop.permute.xlu0 %255
    %v258 = vmul.f32 %v252, %v256
    %260 = vset.pattern.permute.xlu0 0
    %261 = vperm.xlu0 %260, %v50
    %v262 = vpop.permute.xlu0 %261
    %v264 = vadd.f32 %v258, %v262
    %266 = vset.pattern.permute.xlu0 0
    %267 = vperm.xlu0 %266, %v52
    %v268 = vpop.permute.xlu0 %267
    %vm270 = vcmask 48128
    %v272 = vsel %vm270, %v51, 0
    %vm274 = vcmask 1045504
    %v276 = vsel %vm274, %v264, 0
    %278 = vmatpush.msra.mxu0 0.0
    %279 = vmatpush.msra.mxu0 0.0
    %280 = vmatpush.msra.mxu0 0.0
    %281 = vmatpush.msra.mxu0 0.0
    %282 = vmatpush.msra.mxu0 0.0
    %283 = vmatpush.msra.mxu0 0.0
    %284 = vmatpush.msra.mxu0 0.0
    %285 = vmatpush.msra.mxu0 0.0
    %286 = vmatpush.msra.mxu0 0.0
    %287 = vmatpush.msra.mxu0 0.0
    %288 = vmatpush.msra.mxu0 0.0
    %289 = vmatpush.msra.mxu0 0.0
    %290 = vmatpush.msra.mxu0 0.0
    %291 = vmatpush.msra.mxu0 0.0
    %292 = vmatpush.msra.mxu0 0.0
    %293 = vmatpush.msra.mxu0 %v276
    %294 = vmatmul.f32.gmra.mxu0 %v272
    %v295 = vpop.f32.mrf.mxu0
    %v296 = vadd.f32 %v268, %v295
    %297 = vdwg.mxu0
    %v298 = vsel %vm105, %v296, -inf
    %v299 = vrot.slane %v298, 4
    %v300 = vmax.f32 %v298, %v299
    %v301 = vrot.slane %v300, 2
    %v302 = vmax.f32 %v300, %v301
    %v303 = vrot.slane %v302, 1
    %v304 = vmax.f32 %v302, %v303
    %v305 = vsub.f32 %v296, %v304
    %v306 = vmul.f32 %v305, 1.442695
    %v307 = vpow.pop %v306
    %v308 = vsel %vm105, %v307, 0.0
    %v309 = vrot.slane %v308, 4
    %v310 = vadd.f32 %v308, %v309
    %v311 = vrot.slane %v310, 2
    %v312 = vadd.f32 %v310, %v311
    %v313 = vrot.slane %v312, 1
    %v314 = vadd.f32 %v312, %v313
    %v315 = vrcp.pop %v314
    %v316 = vmul.f32 %v314, %v315
    %v317 = vsub.f32 1.0, %v316
    %v318 = vmul.f32 %v315, %v317
    %v319 = vadd.f32 %v315, %v318
    %vm320 = vweird.f32 %v314
    %vm321 = vweird.f32 %v315
    %vm322 = vmor %vm320, %vm321
    %v323 = vsel %vm322, %v315, %v319
    %v324 = vand.u32 2147483647, %v314
    %vm325 = vcmp.eq.f32.partialorder %v324, 8.507059e+37
    %v326 = vand.u32 %v314, 2147483648
    %v327 = vor.u32 1.1754944e-38, %v326
    %v328 = vsel %vm325, %v327, %v323
    %v329 = vmul.f32 %v307, %v328
    %330 = vst.msk [vmem:[#allocation2] sm:$0xf] %vm105, %v329
    // Predicated region
    $region46: #{_net_forward_impl.1} parent=1 // pred_check
      _
    $region47: #{_net_forward_impl.1} parent=1 // pred_check_branch
      %332 = sbr.rel (0) target = $region49
    $region48: #{_net_forward_impl.1} parent=1 // pred_region
      %334 = vsyncadd [#allocation3], 0
      %s336 = sshll.u32 [#allocation2], 4
      %s337 = int_to_ptr.vmem [resolvable:$true] %s336
      %s338 = sshll.u32 %s11, 4
      %s339 = int_to_ptr.hbm [resolvable:$true] %s338
      %341 = dma.vmem_to_hbm [thread:$0]  %s337, 64, %s339, [#allocation3]
    $region49: #{_net_forward_impl.1} parent=1 // pred_fallthru
      _
    // Predicated region
    $region50: #{_net_forward_impl.1} parent=1 // pred_check
      _
    $region51: #{_net_forward_impl.1} parent=1 // pred_check_branch
      %343 = sbr.rel (0) target = $region53
    $region52: #{_net_forward_impl.1} parent=1 // pred_region
      %345 = dma.done [#allocation3], 64
    $region53: #{_net_forward_impl.1} parent=1 // pred_fallthru
      _
    %346 = vsyncpa [#allocation3], 1

</llo_original>
